<compile_context>
chip_gen: v5e
topology: v5e:2x2
jax: 0.10.0
libtpu: 0.0.40
codegen_flags: <defaults>
</compile_context>

<pallas_src>
import jax
import jax.numpy as jnp
from jax.experimental import pallas as pl
from jax.experimental.pallas import tpu as pltpu


def dup_kernel(x_ref, o_ref):
    # x_ref: (tm, tf) input tile.  o_ref: (tm, 2, tf) output tile.
    # Write the tile into both slots of the duplicated middle axis.
    v = x_ref[...]
    o_ref[:, 0, :] = v
    o_ref[:, 1, :] = v


def _cdiv(a, b):
    return -(-a // b)


def _round_up(v, m):
    return _cdiv(v, m) * m


def _round_down(v, m):
    return max(m, (v // m) * m)


def _select_tiles(M, F, itemsize):
    """Pick (tm, tf) so the double-buffered VMEM footprint stays ~<= 16 MiB
    (v7x-safe) while tiles stay large and lane-dense."""
    # Native sublane tile for this dtype (f32: 8, bf16: 16, int8: 32).  The
    # size-2 middle dim of the output block is padded to this in VMEM.
    sub = max(8, 32 // itemsize)
    # Per (tm, tf) input element the pipeline holds:
    #   2 x input buffers (tm*tf) + 2 x output buffers (tm * sub * tf padded)
    budget_bytes = 16 * 1024 * 1024
    max_elems = max(8 * 128, budget_bytes // (2 * itemsize * (1 + sub)))

    # Lane tile: full row when affordable (legal even if F % 128 != 0 because
    # it equals the full array dim), otherwise the largest 128-aligned width
    # inside the budget.  Grid uses cdiv, so tf need NOT divide F.
    min_rows = M if M < sub else sub
    tf_cap = _round_down(max_elems // max(min_rows, 1), 128)
    tf = F if F <= tf_cap else tf_cap

    # Row tile: full M for tiny M (legal: equals array dim), otherwise a
    # multiple of `sub` inside the budget, capped near ceil(M/2) so there are
    # >= 2 row blocks for v7x's two TensorCores when M >= 16.
    # NOTE: for M < 8 the vregs use only M of 8 sublanes; acceptable for the
    # tiny smoke-test shapes (folding rows into sublanes is not worth the
    # index-map complexity here).
    if M < sub:
        tm = M
    else:
        tm = _round_down(max_elems // tf, sub)
        if M >= 2 * sub:
            tm = min(tm, _round_up(_cdiv(M, 2), sub))
        tm = min(tm, _round_up(M, sub))
    return tm, tf


def model_forward(x):
    """out[m, c, :] = x.reshape(B//2, -1)[m, :] for c in {0, 1}."""
    B, C, H, W = x.shape
    assert B % 2 == 0, "batch must be even (view(B/2, -1))"
    M = B // 2
    F = (B * C * H * W) // M  # = 2*C*H*W

    # Glue flatten (same row-major view the PyTorch code takes).
    xf = x.reshape(M, F)

    itemsize = jnp.dtype(x.dtype).itemsize
    tm, tf = _select_tiles(M, F, itemsize)
    grid = (pl.cdiv(M, tm), pl.cdiv(F, tf))

    out = pl.pallas_call(
        dup_kernel,
        out_shape=jax.ShapeDtypeStruct((M, 2, F), x.dtype),
        grid_spec=pltpu.PrefetchScalarGridSpec(
            num_scalar_prefetch=0,
            grid=grid,
            # Input tile stays a plain lane-dense (tm, tf) block.
            in_specs=[pl.BlockSpec((tm, tf), lambda i, j: (i, j))],
            # Output block covers the full duplicated axis (size 2 == full
            # array dim, so always legal); partial edge blocks in rows/lanes
            # are masked by Pallas.
            out_specs=pl.BlockSpec((tm, 2, tf), lambda i, j: (i, 0, j)),
        ),
        compiler_params=pltpu.CompilerParams(
            dimension_semantics=("parallel", "parallel"),
            vmem_limit_bytes=32 * 1024 * 1024,
        ),
    )(xf)
    return out


def _reference(x):
    M = x.shape[0] // 2
    xf = x.reshape(M, -1)
    return jnp.stack([xf, xf], axis=0).transpose(1, 0, 2)


if __name__ == "__main__":
    key = jax.random.PRNGKey(0)

    # Small shape consistent with the module (B even, NCHW), 128-aligned row.
    B, C, H, W = 2, 4, 16, 16
    x = jax.random.normal(key, (B, C, H, W), dtype=jnp.float32)
    out = jax.block_until_ready(model_forward(x))
    ref = _reference(x)
    assert out.shape == (B // 2, 2, 2 * C * H * W), out.shape
    assert jnp.allclose(out, ref), "mismatch vs reference (aligned case)"

    # Non-128-aligned row width (exercises the full-row, non-padded path).
    x2 = jax.random.normal(jax.random.PRNGKey(0), (4, 3, 5, 7), dtype=jnp.float32)
    out2 = jax.block_until_ready(model_forward(x2))
    ref2 = _reference(x2)
    assert out2.shape == (2, 2, 2 * 3 * 5 * 7), out2.shape
    assert jnp.allclose(out2, ref2), "mismatch vs reference (non-aligned case)"

    # Medium case: multiple row and lane blocks with masked edge blocks in
    # both dimensions (M=11 not divisible by tm, F not divisible by tf).
    x3 = jax.random.normal(jax.random.PRNGKey(0), (22, 57, 16, 16), dtype=jnp.float32)
    out3 = jax.block_until_ready(model_forward(x3))
    ref3 = _reference(x3)
    assert out3.shape == (11, 2, 2 * 57 * 16 * 16), out3.shape
    assert jnp.allclose(out3, ref3), "mismatch vs reference (multi-block case)"

    print("KERNEL_OK")
</pallas_src>

<mosaic_0001>
module attributes {stable_mosaic.version = 11 : i64} {
  func.func @dup_kernel(%arg0: i32, %arg1: i32, %arg2: memref<1x2048xf32, #tpu.memory_space<vmem>>, %arg3: memref<1x2x2048xf32, #tpu.memory_space<vmem>>) attributes {dimension_semantics = [#tpu.dimension_semantics<parallel>, #tpu.dimension_semantics<parallel>], iteration_bounds = array<i64: 1, 1>, scalar_prefetch = 0 : i64, scratch_operands = 0 : i64, tpu.core_type = #tpu.core_type<tc>, window_params = [{transform_indices = @transform_0, window_bounds = array<i64: 1, 2048>}, {transform_indices = @transform_1, window_bounds = array<i64: 1, 2, 2048>}]} {
    %c0 = arith.constant 0 : index
    %c0_0 = arith.constant 0 : index
    %0 = vector.load %arg2[%c0, %c0_0] : memref<1x2048xf32, #tpu.memory_space<vmem>>, vector<1x2048xf32>
    %c0_1 = arith.constant 0 : index
    %c0_2 = arith.constant 0 : index
    %c0_3 = arith.constant 0 : index
    %1 = vector.load %arg3[%c0_1, %c0_2, %c0_3] : memref<1x2x2048xf32, #tpu.memory_space<vmem>>, vector<1x1x2048xf32>
    %2 = vector.shape_cast %1 : vector<1x1x2048xf32> to vector<1x2048xf32>
    %3 = vector.shape_cast %0 : vector<1x2048xf32> to vector<1x1x2048xf32>
    tpu.vector_store %arg3[%c0_1, %c0_2, %c0_3], %3 {strides = array<i32>} : memref<1x2x2048xf32, #tpu.memory_space<vmem>>, vector<1x1x2048xf32>,
    %c0_4 = arith.constant 0 : index
    %c1 = arith.constant 1 : index
    %c0_5 = arith.constant 0 : index
    %4 = vector.load %arg3[%c0_4, %c1, %c0_5] : memref<1x2x2048xf32, #tpu.memory_space<vmem>>, vector<1x1x2048xf32>
    %5 = vector.shape_cast %4 : vector<1x1x2048xf32> to vector<1x2048xf32>
    %6 = vector.shape_cast %0 : vector<1x2048xf32> to vector<1x1x2048xf32>
    tpu.vector_store %arg3[%c0_4, %c1, %c0_5], %6 {strides = array<i32>} : memref<1x2x2048xf32, #tpu.memory_space<vmem>>, vector<1x1x2048xf32>,
    return
  }
  func.func @transform_0(%arg0: i32, %arg1: i32) -> (i32, i32) {
    %c0_i32 = arith.constant 0 : i32
    return %arg0, %arg1 : i32, i32
  }
  func.func @transform_1(%arg0: i32, %arg1: i32) -> (i32, i32, i32) {
    %c0_i32 = arith.constant 0 : i32
    %c0_i32_0 = arith.constant 0 : i32
    return %arg0, %c0_i32, %arg1 : i32, i32, i32
  }
}

</mosaic_0001>

<llo_original>
// kernel: tpu_custom_call.1
$region0: #{tpu_custom_call.1}
  #allocation0 [shape = 'u32[]', space=smem, size = 0x4, offset = 0x4, fixed_abs, tag = 'smem constant byte address 0x4 - core index']
  #allocation1 [shape = 'u32[72,128]{1,0:T(1,128)}', space=vmem, size = 0x9000, scoped, tag = 'internal scratch']
  %s0 = inlined_call_operand.hbm [shape: f32[1,2048], index: 0, kind: input, shape index: {}]
  %s1 = inlined_call_operand.hbm [shape: f32[1,2,2048], index: 1, kind: output, shape index: {}]
  %s2 = sld [smem:[#allocation0]]
  $region18: #{tpu_custom_call.1} parent=0
    _
  %s4 = ssub.s32 1, %s2
  %s5 = scalar_select 0, %s4, %s2
  $region1: #{tpu_custom_call.1} parent=0
    #allocation2 [shape = 'u8[8192]{0}', space=vmem, size = 0x2000, scoped, tag = 'input window, operand 0, single buffered']
    #allocation3 [shape = 's32[1]{0}', space=sflag, size = 0x4, scoped, tag = 'scoped memory for tpu_custom_call.1']
    #allocation4 [shape = 's32[1]{0}', space=sflag, size = 0x4, scoped, tag = 'scoped memory for tpu_custom_call.1']
    #allocation5 [shape = 'u8[16384]{0}', space=vmem, size = 0x4000, scoped, tag = 'output window, operand 0, single buffered']
    %6 = vsyncpa [#allocation3], 0
    %7 = vsyncpa [#allocation4], 0
    // Predicated region
    $region2: #{tpu_custom_call.1} parent=1 // pred_check
      _
    $region3: #{tpu_custom_call.1} parent=1 // pred_check_branch
      %9 = sbr.rel (0) target = $region5
    $region4: #{tpu_custom_call.1} parent=1 // pred_region
      %11 = vsyncadd [#allocation3], 0
      %s13 = sshll.u32 %s0, 4
      %s14 = int_to_ptr.hbm [resolvable:$true] %s13
      %s15 = sshll.u32 [#allocation2], 4
      %s16 = int_to_ptr.vmem [resolvable:$true] %s15
      %18 = dma.hbm_to_vmem [thread:$0]  %s14, 256, %s16, [#allocation3]
    $region5: #{tpu_custom_call.1} parent=1 // pred_fallthru
      _
    // Predicated region
    $region6: #{tpu_custom_call.1} parent=1 // pred_check
      _
    $region7: #{tpu_custom_call.1} parent=1 // pred_check_branch
      %20 = sbr.rel (0) target = $region9
    $region8: #{tpu_custom_call.1} parent=1 // pred_region
      %22 = dma.done [#allocation3], 256
    $region9: #{tpu_custom_call.1} parent=1 // pred_fallthru
      _
    %v23 = vld [vmem:[#allocation2] sm:$0xff]
    %v24 = vld [vmem:[#allocation2 + $0x8] sm:$0xff]
    %25 = vst [vmem:[#allocation5] ss:$2 sm:$0xff] %v23
    %s26 = scalar_lea.vmem [#allocation5], 16
    %27 = vst [vmem:[%s26] ss:$2 sm:$0xff] %v24
    %s28 = scalar_lea.vmem [#allocation5], 1
    %29 = vst [vmem:[%s28] ss:$2 sm:$0xff] %v23
    %s30 = scalar_lea.vmem [#allocation5], 17
    %31 = vst [vmem:[%s30] ss:$2 sm:$0xff] %v24
    // Predicated region
    $region10: #{tpu_custom_call.1} parent=1 // pred_check
      _
    $region11: #{tpu_custom_call.1} parent=1 // pred_check_branch
      %33 = sbr.rel (0) target = $region13
    $region12: #{tpu_custom_call.1} parent=1 // pred_region
      %35 = vsyncadd [#allocation4], 0
      %s37 = sshll.u32 [#allocation5], 4
      %s38 = int_to_ptr.vmem [resolvable:$true] %s37
      %s39 = sshll.u32 %s1, 4
      %s40 = int_to_ptr.hbm [resolvable:$true] %s39
      %42 = dma.vmem_to_hbm [thread:$0]  %s38, 512, %s40, [#allocation4]
    $region13: #{tpu_custom_call.1} parent=1 // pred_fallthru
      _
    // Predicated region
    $region14: #{tpu_custom_call.1} parent=1 // pred_check
      _
    $region15: #{tpu_custom_call.1} parent=1 // pred_check_branch
      %44 = sbr.rel (0) target = $region17
    $region16: #{tpu_custom_call.1} parent=1 // pred_region
      %46 = dma.done [#allocation4], 512
    $region17: #{tpu_custom_call.1} parent=1 // pred_fallthru
      _
    %47 = vsyncpa [#allocation3], 1
    %48 = vsyncpa [#allocation4], 1

</llo_original>
